<compile_context>
chip_gen: v7x
topology: tpu7x:2x2x1
jax: 0.10.0
libtpu: 0.0.40
codegen_flags: <defaults>
</compile_context>

<pallas_src>
import jax
import jax.numpy as jnp
import numpy as np
from jax.experimental import pallas as pl
from jax.experimental.pallas import tpu as pltpu


def _round_up(a, b):
    return ((a + b - 1) // b) * b


def _cdiv(a, b):
    return (a + b - 1) // b


def cross_attention_kernel(xT_ref, yT_ref, wx_ref, wmb_ref, oT_ref):
    # 1x1 Conv1d over the first 9 input channels: (16, 9) @ (9, T) on the MXU.
    o = jnp.dot(wx_ref[...], xT_ref[...], preferred_element_type=jnp.float32)
    # AdaptiveMaxPool1d(1): max over the sequence axis (sublane axis) -> (1, T).
    m = jnp.max(yT_ref[...], axis=0, keepdims=True)
    # Rank-1 max-branch contribution + bias.  wmb[:, 0] = W[:, 9], wmb[:, 1] = bias.
    oT_ref[...] = o + wmb_ref[:, 0:1] * m + wmb_ref[:, 1:2]


def cross_attention(x, y, weight, bias, *, row_tile=None,
                    block_vmem_budget_bytes=20 * 1024 * 1024):
    """
    x      : (B, C, 9)   float32
    y      : (B, C, Ly)  float32
    weight : (16, 10)    float32   (Conv1d weight, kernel_size=1 squeezed)
    bias   : (16,)       float32
    returns: (B, C, 16)  float32
    """
    B, C, Dx = x.shape
    By, Cy, Ly = y.shape
    assert Dx == 9 and weight.shape == (16, 10) and bias.shape == (16,)
    assert (By, Cy) == (B, C)

    rows = B * C

    # ---- lane-dense layout: rows on the lane (minor) axis --------------------
    xT = x.reshape(rows, Dx).T          # (9, rows)
    yT = y.reshape(rows, Ly).T          # (Ly, rows)

    # ---- tile-size selection (VMEM budgeted with padded block sizes) ---------
    Lyp = _round_up(max(Ly, 1), 8)      # sublane padding of the y block
    if row_tile is None:
        # per-lane bytes of double-buffered blocks: 2 * 4B * (pad8(9) + pad8(Ly) + 16)
        per_lane_bytes = 2 * 4 * (16 + Lyp + 16)
        t = block_vmem_budget_bytes // per_lane_bytes
        t = max(128, (t // 128) * 128)                       # lane-dense tiles
        t = min(t, 2048)                                     # diminishing returns
        # keep >= 2 grid steps when the problem allows (v7x: 2 TCs shard "parallel")
        t = min(t, max(128, _round_up(_cdiv(rows, 2), 128)))
        row_tile = t
    assert row_tile % 128 == 0, "row_tile must be a multiple of 128 (lane width)"

    padded_rows = _round_up(rows, row_tile)
    if padded_rows != rows:
        xT = jnp.pad(xT, ((0, 0), (0, padded_rows - rows)))
        yT = jnp.pad(yT, ((0, 0), (0, padded_rows - rows)))

    # ---- constants: Wx (16,9) and folded [Wm | bias] (16,2) -------------------
    wx = weight[:, :9]                                   # (16, 9)
    wmb = jnp.stack([weight[:, 9], bias], axis=1)        # (16, 2)

    # Explicit scoped-VMEM limit: above v5e's 16-MiB default, capped below every
    # generation's physical VMEM (v7x: 64 MiB per TensorCore).
    block_bytes = 2 * 4 * row_tile * (16 + Lyp + 16) + (1 << 20)
    vmem_limit = max(32 * 1024 * 1024, block_bytes + (8 << 20))
    vmem_limit = min(vmem_limit, 56 * 1024 * 1024)

    grid = (padded_rows // row_tile,)

    outT = pl.pallas_call(
        cross_attention_kernel,
        out_shape=jax.ShapeDtypeStruct((16, padded_rows), jnp.float32),
        grid_spec=pltpu.PrefetchScalarGridSpec(
            num_scalar_prefetch=0,
            grid=grid,
            in_specs=[
                pl.BlockSpec((Dx, row_tile), lambda i: (0, i)),   # xT tile
                pl.BlockSpec((Ly, row_tile), lambda i: (0, i)),   # yT tile
                pl.BlockSpec((16, 9), lambda i: (0, 0)),          # Wx (resident)
                pl.BlockSpec((16, 2), lambda i: (0, 0)),          # [Wm | bias]
            ],
            out_specs=pl.BlockSpec((16, row_tile), lambda i: (0, i)),
        ),
        compiler_params=pltpu.CompilerParams(
            dimension_semantics=("parallel",),
            vmem_limit_bytes=int(vmem_limit),
        ),
    )(xT, yT, wx, wmb)

    out_rows = outT[:, :rows].T                 # (rows, 16)
    return out_rows.reshape(B, C, 16)


def _reference(x, y, weight, bias):
    m = jnp.max(y, axis=-1, keepdims=True)               # (B, C, 1)
    z = jnp.concatenate([x, m], axis=-1)                 # (B, C, 10)
    return jnp.einsum("bci,oi->bco", z, weight) + bias   # (B, C, 16)


if __name__ == "__main__":
    key = jax.random.PRNGKey(0)
    k1, k2, k3, k4 = jax.random.split(key, 4)

    B, C, Ly = 2, 16, 8
    x = jax.random.normal(k1, (B, C, 9), dtype=jnp.float32)
    y = jax.random.normal(k2, (B, C, Ly), dtype=jnp.float32)

    # Deterministic synthetic Conv1d(10, 16, k=1) parameters
    # (PyTorch default init bound = 1/sqrt(fan_in) = 1/sqrt(10))
    bound = 1.0 / np.sqrt(10.0)
    weight = jax.random.uniform(k3, (16, 10), jnp.float32, -bound, bound)
    bias = jax.random.uniform(k4, (16,), jnp.float32, -bound, bound)

    out = cross_attention(x, y, weight, bias)
    out = jax.block_until_ready(out)

    ref = _reference(x, y, weight, bias)
    np.testing.assert_allclose(np.asarray(out), np.asarray(ref), rtol=1e-5, atol=1e-5)

    print("KERNEL_OK")
</pallas_src>

<mosaic_0001>
module attributes {stable_mosaic.version = 11 : i64} {
  func.func @cross_attention_kernel(%arg0: i32, %arg1: memref<9x128xf32, #tpu.memory_space<vmem>>, %arg2: memref<8x128xf32, #tpu.memory_space<vmem>>, %arg3: memref<16x9xf32, #tpu.memory_space<vmem>>, %arg4: memref<16x2xf32, #tpu.memory_space<vmem>>, %arg5: memref<16x128xf32, #tpu.memory_space<vmem>>) attributes {dimension_semantics = [#tpu.dimension_semantics<parallel>], iteration_bounds = array<i64: 1>, scalar_prefetch = 0 : i64, scratch_operands = 0 : i64, tpu.core_type = #tpu.core_type<tc>, window_params = [{transform_indices = @transform_0, window_bounds = array<i64: 9, 128>}, {transform_indices = @transform_1, window_bounds = array<i64: 8, 128>}, {pipeline_mode = #tpu.pipeline_mode<synchronous>, transform_indices = @transform_2, window_bounds = array<i64: 16, 9>}, {pipeline_mode = #tpu.pipeline_mode<synchronous>, transform_indices = @transform_3, window_bounds = array<i64: 16, 2>}, {transform_indices = @transform_4, window_bounds = array<i64: 16, 128>}]} {
    %c0 = arith.constant 0 : index
    %c0_0 = arith.constant 0 : index
    %0 = vector.load %arg3[%c0, %c0_0] : memref<16x9xf32, #tpu.memory_space<vmem>>, vector<16x9xf32>
    %c0_1 = arith.constant 0 : index
    %c0_2 = arith.constant 0 : index
    %1 = vector.load %arg1[%c0_1, %c0_2] : memref<9x128xf32, #tpu.memory_space<vmem>>, vector<9x128xf32>
    %cst = arith.constant dense<0.000000e+00> : vector<16x128xf32>
    %2 = tpu.matmul %0, %1, %cst {dimension_numbers = #tpu.dot_dimension_numbers<[1], [0], [0], [1], [0, 0, 1, 1], [], []>} : vector<16x9xf32>, vector<9x128xf32>, vector<16x128xf32> -> vector<16x128xf32>
    %c0_3 = arith.constant 0 : index
    %c0_4 = arith.constant 0 : index
    %3 = vector.load %arg2[%c0_3, %c0_4] : memref<8x128xf32, #tpu.memory_space<vmem>>, vector<8x128xf32>
    %cst_5 = arith.constant dense<0xFF800000> : vector<128xf32>
    %4 = vector.multi_reduction <maximumf>, %3, %cst_5 [0] : vector<8x128xf32> to vector<128xf32>
    %5 = vector.shape_cast %4 : vector<128xf32> to vector<1x128xf32>
    %c0_6 = arith.constant 0 : index
    %c0_7 = arith.constant 0 : index
    %6 = vector.load %arg4[%c0_6, %c0_7] : memref<16x2xf32, #tpu.memory_space<vmem>>, vector<16x1xf32>
    %7 = vector.broadcast %6 : vector<16x1xf32> to vector<16x128xf32>
    %8 = vector.broadcast %5 : vector<1x128xf32> to vector<16x128xf32>
    %9 = arith.mulf %7, %8 : vector<16x128xf32>
    %10 = arith.addf %2, %9 : vector<16x128xf32>
    %c0_8 = arith.constant 0 : index
    %c1 = arith.constant 1 : index
    %11 = vector.load %arg4[%c0_8, %c1] : memref<16x2xf32, #tpu.memory_space<vmem>>, vector<16x1xf32>
    %12 = vector.broadcast %11 : vector<16x1xf32> to vector<16x128xf32>
    %13 = arith.addf %10, %12 : vector<16x128xf32>
    %c0_9 = arith.constant 0 : index
    %c0_10 = arith.constant 0 : index
    %14 = vector.load %arg5[%c0_9, %c0_10] : memref<16x128xf32, #tpu.memory_space<vmem>>, vector<16x128xf32>
    tpu.vector_store %arg5[%c0_9, %c0_10], %13 {strides = array<i32>} : memref<16x128xf32, #tpu.memory_space<vmem>>, vector<16x128xf32>,
    return
  }
  func.func @transform_0(%arg0: i32) -> (i32, i32) {
    %c0_i32 = arith.constant 0 : i32
    %c0_i32_0 = arith.constant 0 : i32
    return %c0_i32, %arg0 : i32, i32
  }
  func.func @transform_1(%arg0: i32) -> (i32, i32) {
    %c0_i32 = arith.constant 0 : i32
    %c0_i32_0 = arith.constant 0 : i32
    return %c0_i32, %arg0 : i32, i32
  }
  func.func @transform_2(%arg0: i32) -> (i32, i32) {
    %c0_i32 = arith.constant 0 : i32
    %c0_i32_0 = arith.constant 0 : i32
    %c0_i32_1 = arith.constant 0 : i32
    return %c0_i32, %c0_i32_0 : i32, i32
  }
  func.func @transform_3(%arg0: i32) -> (i32, i32) {
    %c0_i32 = arith.constant 0 : i32
    %c0_i32_0 = arith.constant 0 : i32
    %c0_i32_1 = arith.constant 0 : i32
    return %c0_i32, %c0_i32_0 : i32, i32
  }
  func.func @transform_4(%arg0: i32) -> (i32, i32) {
    %c0_i32 = arith.constant 0 : i32
    %c0_i32_0 = arith.constant 0 : i32
    return %c0_i32, %arg0 : i32, i32
  }
}

</mosaic_0001>

<llo_original>
// kernel: tpu_custom_call.1
$region0: #{tpu_custom_call.1}
  #allocation0 [shape = 'u32[]', space=smem, size = 0x4, offset = 0x4, fixed_abs, tag = 'smem constant byte address 0x4 - core index']
  #allocation1 [shape = 'u32[144,128]{1,0:T(1,128)}', space=vmem, size = 0x12000, scoped, tag = 'internal scratch']
  %s0 = inlined_call_operand.vmem [shape: f32[9,128], index: 0, kind: input, shape index: {}]
  %s1 = inlined_call_operand.hbm [shape: f32[8,128], index: 1, kind: input, shape index: {}]
  %s2 = inlined_call_operand.hbm [shape: f32[16,9], index: 2, kind: input, shape index: {}]
  %s3 = inlined_call_operand.vmem [shape: f32[16,2], index: 3, kind: input, shape index: {}]
  %s4 = inlined_call_operand.hbm [shape: f32[16,128], index: 4, kind: output, shape index: {}]
  %s5 = sld [smem:[#allocation0]]
  $region34: #{tpu_custom_call.1} parent=0
    _
  %s7 = ssub.s32 1, %s5
  %s8 = scalar_select 0, %s7, %s5
  $region1: #{tpu_custom_call.1} parent=0
    #allocation2 [shape = 'u8[4096]{0}', space=vmem, size = 0x1000, scoped, tag = 'input window, operand 1, single buffered']
    #allocation3 [shape = 's32[1]{0}', space=sflag, size = 0x4, scoped, tag = 'scoped memory for tpu_custom_call.1']
    #allocation4 [shape = 's32[1]{0}', space=sflag, size = 0x4, scoped, tag = 'scoped memory for tpu_custom_call.1']
    #allocation5 [shape = 'u8[8192]{0}', space=vmem, size = 0x2000, scoped, tag = 'input window, operand 2, single buffered']
    #allocation6 [shape = 's32[1]{0}', space=sflag, size = 0x4, scoped, tag = 'scoped memory for tpu_custom_call.1']
    #allocation7 [shape = 'u8[8192]{0}', space=vmem, size = 0x2000, scoped, tag = 'output window, operand 0, single buffered']
    %9 = vsyncpa [#allocation3], 0
    %10 = vsyncpa [#allocation6], 0
    %11 = vsyncpa [#allocation4], 0
    // Predicated region
    $region2: #{tpu_custom_call.1} parent=1 // pred_check
      _
    $region3: #{tpu_custom_call.1} parent=1 // pred_check_branch
      %13 = sbr.rel (0) target = $region5
    $region4: #{tpu_custom_call.1} parent=1 // pred_region
      _
    $region5: #{tpu_custom_call.1} parent=1 // pred_fallthru
      _
    // Predicated region
    $region6: #{tpu_custom_call.1} parent=1 // pred_check
      _
    $region7: #{tpu_custom_call.1} parent=1 // pred_check_branch
      %15 = sbr.rel (0) target = $region9
    $region8: #{tpu_custom_call.1} parent=1 // pred_region
      %s17 = ssub.s32 128, 128
      %18 = vsyncadd [#allocation3], %s17
      %s20 = sshll.u32 [#allocation2], 4
      %s21 = int_to_ptr.vmem [resolvable:$true] %s20
      %23 = dma.hbm_to_vmem [thread:$0]  %s1, 128, %s21, [#allocation3]
    $region9: #{tpu_custom_call.1} parent=1 // pred_fallthru
      _
    // Predicated region
    $region10: #{tpu_custom_call.1} parent=1 // pred_check
      _
    $region11: #{tpu_custom_call.1} parent=1 // pred_check_branch
      %25 = sbr.rel (0) target = $region13
    $region12: #{tpu_custom_call.1} parent=1 // pred_region
      %s27 = ssub.s32 256, 256
      %28 = vsyncadd [#allocation6], %s27
      %s29 = sshll.u32 [#allocation5], 4
      %s30 = int_to_ptr.vmem [resolvable:$true] %s29
      %35 = dma.hbm_to_vmem [thread:$0]  %s2, 256, %s30, [#allocation6], 128, 128, 8
    $region13: #{tpu_custom_call.1} parent=1 // pred_fallthru
      _
    // Predicated region
    $region14: #{tpu_custom_call.1} parent=1 // pred_check
      _
    $region15: #{tpu_custom_call.1} parent=1 // pred_check_branch
      %37 = sbr.rel (0) target = $region17
    $region16: #{tpu_custom_call.1} parent=1 // pred_region
      _
    $region17: #{tpu_custom_call.1} parent=1 // pred_fallthru
      _
    // Predicated region
    $region18: #{tpu_custom_call.1} parent=1 // pred_check
      _
    $region19: #{tpu_custom_call.1} parent=1 // pred_check_branch
      %39 = sbr.rel (0) target = $region21
    $region20: #{tpu_custom_call.1} parent=1 // pred_region
      %40 = dma.done [#allocation3], 128
    $region21: #{tpu_custom_call.1} parent=1 // pred_fallthru
      _
    // Predicated region
    $region22: #{tpu_custom_call.1} parent=1 // pred_check
      _
    $region23: #{tpu_custom_call.1} parent=1 // pred_check_branch
      %42 = sbr.rel (0) target = $region25
    $region24: #{tpu_custom_call.1} parent=1 // pred_region
      %43 = dma.done [#allocation6], 256
    $region25: #{tpu_custom_call.1} parent=1 // pred_fallthru
      _
    %v44 = vld [vmem:[#allocation5] sm:$0xff]
    %v45 = vld [vmem:[#allocation5 + $0x8] sm:$0xff]
    %v46 = vld [vmem:[%s0] sm:$0xff]
    %v47 = vld [vmem:[%s0 + $0x8] sm:$0x1]
    %v48 = vld [vmem:[#allocation2] sm:$0xff]
    %v49 = vrot.slane %v48, 4
    %v50 = vmax.f32 %v48, %v49
    %v51 = vrot.slane %v50, 2
    %v52 = vmax.f32 %v50, %v51
    %v53 = vrot.slane %v52, 1
    %v54 = vmax.f32 %v52, %v53
    %v55 = vld [vmem:[%s3] sm:$0xff]
    %v56 = vld [vmem:[%s3 + $0x8] sm:$0xff]
    %58 = vset.pattern.permute.xlu0 0
    %59 = vperm.xlu0 %58, %v55
    %v60 = vpop.permute.xlu0 %59
    %63 = vset.pattern.permute.xlu0 0
    %64 = vperm.xlu0 %63, %v56
    %v65 = vpop.permute.xlu0 %64
    %v67 = vmul.f32 %v60, %v54
    %v68 = vmul.f32 %v65, %v54
    %vm69 = vcmask 72704
    %v71 = vsel %vm69, %v44, 0
    %v74 = vsel %vm69, %v45, 0
    %vm76 = vcmask 1040384
    %v78 = vsel %vm76, %v47, 0
    %80 = vmatprep.subr.mxu0 0.0
    %81 = vmatpush1.msra.mxu0 %v46
    %82 = vmatprep.subr.mxu0 0.0
    %83 = vmatpush1.msra.mxu0 %v78
    %84 = vmatprep.subr.mxu0 0.0
    %85 = vmatpush1.msra.mxu0 0.0
    %86 = vmatprep.subr.mxu0 0.0
    %87 = vmatpush1.msra.mxu0 0.0
    %88 = vmatprep.subr.mxu0 0.0
    %89 = vmatpush1.msra.mxu0 0.0
    %90 = vmatprep.subr.mxu0 0.0
    %91 = vmatpush1.msra.mxu0 0.0
    %92 = vmatprep.subr.mxu0 0.0
    %93 = vmatpush1.msra.mxu0 0.0
    %94 = vmatprep.subr.mxu0 0.0
    %95 = vmatpush1.msra.mxu0 0.0
    %96 = vmatprep.subr.mxu0 0.0
    %97 = vmatpush1.msra.mxu0 0.0
    %98 = vmatprep.subr.mxu0 0.0
    %99 = vmatpush1.msra.mxu0 0.0
    %100 = vmatprep.subr.mxu0 0.0
    %101 = vmatpush1.msra.mxu0 0.0
    %102 = vmatprep.subr.mxu0 0.0
    %103 = vmatpush1.msra.mxu0 0.0
    %104 = vmatprep.subr.mxu0 0.0
    %105 = vmatpush1.msra.mxu0 0.0
    %106 = vmatprep.subr.mxu0 0.0
    %107 = vmatpush1.msra.mxu0 0.0
    %108 = vmatprep.subr.mxu0 0.0
    %109 = vmatpush1.msra.mxu0 0.0
    %110 = vmatprep.subr.mxu0 0.0
    %111 = vmatpush1.msra.mxu0 0.0
    %112 = vmatprep.subr.mxu0 0.0
    %113 = vmatpush1.msra.mxu0 0.0
    %114 = vmatprep.subr.mxu0 0.0
    %115 = vmatpush1.msra.mxu0 0.0
    %116 = vmatprep.subr.mxu0 0.0
    %117 = vmatpush1.msra.mxu0 0.0
    %118 = vmatprep.subr.mxu0 0.0
    %119 = vmatpush1.msra.mxu0 0.0
    %120 = vmatprep.subr.mxu0 0.0
    %121 = vmatpush1.msra.mxu0 0.0
    %122 = vmatprep.subr.mxu0 0.0
    %123 = vmatpush1.msra.mxu0 0.0
    %124 = vmatprep.subr.mxu0 0.0
    %125 = vmatpush1.msra.mxu0 0.0
    %126 = vmatprep.subr.mxu0 0.0
    %127 = vmatpush1.msra.mxu0 0.0
    %128 = vmatprep.subr.mxu0 0.0
    %129 = vmatpush1.msra.mxu0 0.0
    %130 = vmatprep.subr.mxu0 0.0
    %131 = vmatpush1.msra.mxu0 0.0
    %132 = vmatprep.subr.mxu0 0.0
    %133 = vmatpush1.msra.mxu0 0.0
    %134 = vmatprep.subr.mxu0 0.0
    %135 = vmatpush1.msra.mxu0 0.0
    %136 = vmatprep.subr.mxu0 0.0
    %137 = vmatpush1.msra.mxu0 0.0
    %138 = vmatprep.subr.mxu0 0.0
    %139 = vmatpush1.msra.mxu0 0.0
    %140 = vmatprep.subr.mxu0 0.0
    %141 = vmatpush1.msra.mxu0 0.0
    %142 = vmatprep.subr.mxu0 0.0
    %143 = vmatpush1.msra.mxu0 0.0
    %144 = vmatprep.mubr.f32.mxu0 0.0
    %145 = vmatmul.mubr.f32.gmra.mrb[0].mxu0 %v71
    %v146 = vpop.f32.mrb[0].mxu0
    %v147 = vadd.f32 %v67, %v146
    %v148 = vpop.f32.mrb[0].mxu0
    %149 = vmatprep.mubr.f32.mxu0 0.0
    %150 = vmatmul.mubr.f32.gmra.mrb[0].mxu0 %v74
    %v151 = vpop.f32.mrb[0].mxu0
    %v152 = vadd.f32 %v68, %v151
    %v153 = vpop.f32.mrb[0].mxu0
    %154 = vdwg.mxu0
    %155 = vset.pattern.permute.xlu0 1
    %156 = vperm.xlu0 %155, %v55
    %v157 = vpop.permute.xlu0 %156
    %159 = vset.pattern.permute.xlu0 1
    %160 = vperm.xlu0 %159, %v56
    %v161 = vpop.permute.xlu0 %160
    %v163 = vadd.f32 %v147, %v157
    %v164 = vadd.f32 %v152, %v161
    %165 = vst [vmem:[#allocation7] sm:$0xff] %v163
    %166 = vst [vmem:[#allocation7 + $0x8] sm:$0xff] %v164
    // Predicated region
    $region26: #{tpu_custom_call.1} parent=1 // pred_check
      _
    $region27: #{tpu_custom_call.1} parent=1 // pred_check_branch
      %168 = sbr.rel (0) target = $region29
    $region28: #{tpu_custom_call.1} parent=1 // pred_region
      %s170 = ssub.s32 256, 256
      %171 = vsyncadd [#allocation4], %s170
      %s172 = sshll.u32 [#allocation7], 4
      %s173 = int_to_ptr.vmem [resolvable:$true] %s172
      %178 = dma.vmem_to_hbm [thread:$0]  %s173, 256, %s4, [#allocation4], 128, 128, 8
    $region29: #{tpu_custom_call.1} parent=1 // pred_fallthru
      _
    // Predicated region
    $region30: #{tpu_custom_call.1} parent=1 // pred_check
      _
    $region31: #{tpu_custom_call.1} parent=1 // pred_check_branch
      %180 = sbr.rel (0) target = $region33
    $region32: #{tpu_custom_call.1} parent=1 // pred_region
      %181 = dma.done [#allocation4], 256
    $region33: #{tpu_custom_call.1} parent=1 // pred_fallthru
      _
    %182 = vsyncpa [#allocation3], 1
    %183 = vsyncpa [#allocation6], 1
    %184 = vsyncpa [#allocation4], 1

</llo_original>
